<compile_context>
chip_gen: v5e
topology: v5e:2x2
jax: 0.10.0
libtpu: 0.0.40
codegen_flags: <defaults>
</compile_context>

<pallas_src>
import functools

import jax
import jax.numpy as jnp
from jax import lax
from jax.experimental import pallas as pl
from jax.experimental.pallas import tpu as pltpu


def _round_up(x, m):
    return ((x + m - 1) // m) * m


def _cdiv(a, b):
    return -(-a // b)


def _choose_block_rows(n, requested):
    """Row-tile size: lane-multiple, clamped to N, >= 2 grid steps when possible."""
    lane = 128
    if n <= lane:
        # Single full block; block dims equal the full array dims.
        return n
    br = min(int(requested), _round_up(n, lane))
    br = _round_up(max(br, lane), lane)
    # v7x: keep >= 2 grid steps so the "parallel" axis shards across 2 TCs.
    if _cdiv(n, br) < 2:
        br = max(lane, _round_up(_cdiv(n, 2), lane))
    return br


def _brdf_kernel(x_ref, w1t_ref, b1t_ref, w2t_ref, b2t_ref, o_ref, *,
                 n_lobes, constant_fresnel, use_bf16):
    # x tile is (block_rows, d_in); cast to bf16 in-kernel (VPU, hides in a
    # free slot) instead of a separate wrapper-side HBM pass.
    x = x_ref[...]
    if use_bf16:
        x = x.astype(jnp.bfloat16)

    # h^T = W1^T · x^T  : contract d_in on both operands ("A·B^T" MXU form,
    # same dimension_numbers as flash-attention q·k^T). Result (hidden, bm)
    # is lane-dense. Accumulate in f32.
    h = lax.dot_general(w1t_ref[...], x, (((1,), (1,)), ((), ())),
                        preferred_element_type=jnp.float32)
    h = jnp.maximum(h + b1t_ref[...], 0.0)
    if use_bf16:
        # NOTE: extra bf16 rounding between the two layers (documented).
        h = h.astype(jnp.bfloat16)

    # y^T = W2^T · h^T : standard matmul, result (out_dim, bm) lane-dense.
    y = jnp.dot(w2t_ref[...], h,
                preferred_element_type=jnp.float32) + b2t_ref[...]

    # Channel-wise activation; channel index lives on the sublane axis now.
    ch = lax.broadcasted_iota(jnp.int32, y.shape, 0)
    relu_y = jnp.maximum(y, 0.0)
    sig_y = jax.nn.sigmoid(y)
    r0 = jnp.ones_like(y) if constant_fresnel else sig_y
    out = jnp.where(
        ch < 3, relu_y,                                   # diffuse
        jnp.where(ch < 3 + n_lobes, sig_y,                # roughness
                  jnp.where(ch < 3 + 2 * n_lobes,         # specular
                            relu_y,
                            r0)))                         # r0 / fresnel
    o_ref[...] = out.astype(o_ref.dtype)


def brdf_net_forward(x, w1, b1, w2, b2, *, n_lobes, constant_fresnel=True,
                     block_rows=4096, use_bf16=True, channel_first=False,
                     out_dtype=jnp.float32, x_buffer_count=2):
    """Fused BRDFNet forward.

    x: (..., d_in) -> (..., 3 + 3*n_lobes)   (channel_first=False, default)
                   -> (3 + 3*n_lobes, ...)   (channel_first=True; avoids the
                                              wrapper-side transpose pass —
                                              preferred for perf if the
                                              consumer can take channel-first)
    """
    batch_shape = x.shape[:-1]
    d_in = x.shape[-1]
    x2 = x.reshape(-1, d_in)
    n = x2.shape[0]
    hidden = w1.shape[-1]
    out_dim = w2.shape[-1]
    assert out_dim == 3 + 3 * n_lobes and out_dim >= 6 and out_dim % 3 == 0

    # Small resident params, pre-transposed for the feature-major compute.
    w1t = jnp.asarray(w1).T                       # (hidden, d_in)
    w2t = jnp.asarray(w2).T                       # (out_dim, hidden)
    b1t = jnp.reshape(b1, (hidden, 1)).astype(jnp.float32)
    b2t = jnp.reshape(b2, (out_dim, 1)).astype(jnp.float32)
    if use_bf16:
        w1t = w1t.astype(jnp.bfloat16)
        w2t = w2t.astype(jnp.bfloat16)
    # x itself is streamed in its incoming dtype; cast happens in-kernel.

    br = _choose_block_rows(n, block_rows)
    grid = (_cdiv(n, br),)

    # VMEM footprint estimate (lane/sublane padded, double-buffered streams).
    x_itemsize = jnp.dtype(x2.dtype).itemsize
    out_itemsize = jnp.dtype(out_dtype).itemsize
    w_itemsize = jnp.dtype(w1t.dtype).itemsize
    x_tile = _round_up(br, 8) * _round_up(d_in, 128) * x_itemsize
    o_tile = _round_up(out_dim, 8) * _round_up(br, 128) * out_itemsize
    h_tmp = _round_up(hidden, 8) * _round_up(br, 128) * 4
    y_tmp = 4 * _round_up(out_dim, 8) * _round_up(br, 128) * 4
    w_res = 2 * (_round_up(hidden, 8) * _round_up(d_in, 128)
                 + _round_up(out_dim, 8) * _round_up(hidden, 128)) * w_itemsize
    est = max(2, x_buffer_count) * x_tile + 2 * o_tile + h_tmp + y_tmp + w_res
    vmem_limit = int(min(max(est + (4 << 20), 16 << 20), 64 << 20))

    cost = pl.CostEstimate(
        flops=int(2 * n * (d_in * hidden + hidden * out_dim)),
        transcendentals=int(n * (out_dim - 3)),
        bytes_accessed=int(x2.size * x_itemsize
                           + n * out_dim * out_itemsize
                           + w1t.size * w_itemsize + w2t.size * w_itemsize
                           + (b1t.size + b2t.size) * 4),
    )

    x_spec_kwargs = {}
    if x_buffer_count != 2:
        # Optional deeper pipelining of the x stream (review item 8).
        x_spec_kwargs["pipeline_mode"] = pl.Buffered(x_buffer_count)

    in_specs = [
        pl.BlockSpec((br, d_in), lambda i: (i, 0), **x_spec_kwargs),   # x (streamed)
        pl.BlockSpec((hidden, d_in), lambda i: (0, 0)),                # W1^T (resident)
        pl.BlockSpec((hidden, 1), lambda i: (0, 0)),                   # b1   (resident)
        pl.BlockSpec((out_dim, hidden), lambda i: (0, 0)),             # W2^T (resident)
        pl.BlockSpec((out_dim, 1), lambda i: (0, 0)),                  # b2   (resident)
    ]

    kernel = functools.partial(_brdf_kernel, n_lobes=n_lobes,
                               constant_fresnel=constant_fresnel,
                               use_bf16=use_bf16)

    out_t = pl.pallas_call(
        kernel,
        out_shape=jax.ShapeDtypeStruct((out_dim, n), out_dtype),
        grid_spec=pltpu.PrefetchScalarGridSpec(
            num_scalar_prefetch=0,
            grid=grid,
            in_specs=in_specs,
            out_specs=pl.BlockSpec((out_dim, br), lambda i: (0, i)),   # lane-dense
        ),
        compiler_params=pltpu.CompilerParams(
            dimension_semantics=("parallel",),     # shards across v7x's 2 TCs
            vmem_limit_bytes=vmem_limit),
        cost_estimate=cost,
    )(x2, w1t, b1t, w2t, b2t)

    if channel_first:
        return out_t.reshape((out_dim,) + batch_shape)
    # Channel-last (PyTorch) layout: thin transpose back; consumers that can
    # take channel-first should use channel_first=True to avoid this pass.
    return out_t.T.reshape(batch_shape + (out_dim,))


def brdf_net_reference(x, w1, b1, w2, b2, *, n_lobes, constant_fresnel=True):
    """Pure-JAX f32 reference matching the PyTorch semantics exactly."""
    h = jnp.maximum(x @ w1 + b1, 0.0)
    y = h @ w2 + b2
    diffuse = jnp.maximum(y[..., :3], 0.0)
    roughness = jax.nn.sigmoid(y[..., 3:3 + n_lobes])
    specular = jnp.maximum(y[..., 3 + n_lobes:3 + 2 * n_lobes], 0.0)
    r0 = jax.nn.sigmoid(y[..., 3 + 2 * n_lobes:3 + 3 * n_lobes])
    if constant_fresnel:
        r0 = jnp.ones_like(r0)
    return jnp.concatenate((diffuse, roughness, specular, r0), axis=-1)


if __name__ == "__main__":
    # N intentionally NOT a multiple of block_rows / 128 to exercise the
    # ragged-tail (masked edge block) path.
    N = 2000       # flattened rays/pixels
    D_IN = 32      # encoded input feature dim
    HIDDEN = 64    # brdf_mlp hidden width
    N_LOBES = 3    # => out_dim = 3 + 3*n_lobes = 12
    OUT_DIM = 3 + 3 * N_LOBES

    key = jax.random.PRNGKey(0)
    kx, k1, k2, k3, k4 = jax.random.split(key, 5)
    x = jax.random.normal(kx, (N, D_IN), dtype=jnp.float32)
    w1 = jax.random.normal(k1, (D_IN, HIDDEN), dtype=jnp.float32) * 0.1
    b1 = jax.random.normal(k2, (HIDDEN,), dtype=jnp.float32) * 0.01
    w2 = jax.random.normal(k3, (HIDDEN, OUT_DIM), dtype=jnp.float32) * 0.1
    b2 = jax.random.normal(k4, (OUT_DIM,), dtype=jnp.float32) * 0.01

    ref = brdf_net_reference(x, w1, b1, w2, b2, n_lobes=N_LOBES,
                             constant_fresnel=True)

    # f32 path, small blocks (grid=4, ragged last block): near-exact check.
    out_f32 = brdf_net_forward(x, w1, b1, w2, b2, n_lobes=N_LOBES,
                               constant_fresnel=True, block_rows=512,
                               use_bf16=False)
    out_f32 = jax.block_until_ready(out_f32)
    assert out_f32.shape == (N, OUT_DIM)
    assert jnp.allclose(out_f32, ref, atol=1e-4, rtol=1e-4), \
        "f32 kernel mismatch vs reference"

    # bf16 fast path with default (large) block_rows: looser tolerance for the
    # bf16 matmul inputs + inter-layer rounding.
    out_bf16 = brdf_net_forward(x, w1, b1, w2, b2, n_lobes=N_LOBES,
                                constant_fresnel=True, use_bf16=True)
    out_bf16 = jax.block_until_ready(out_bf16)
    assert out_bf16.shape == (N, OUT_DIM)
    assert jnp.allclose(out_bf16, ref, atol=3e-2, rtol=3e-2), \
        "bf16 kernel mismatch vs reference"

    # Channel-first (lane-dense, no wrapper transpose) path.
    out_cf = brdf_net_forward(x, w1, b1, w2, b2, n_lobes=N_LOBES,
                              constant_fresnel=True, use_bf16=True,
                              channel_first=True)
    out_cf = jax.block_until_ready(out_cf)
    assert out_cf.shape == (OUT_DIM, N)
    assert jnp.allclose(out_cf, ref.T, atol=3e-2, rtol=3e-2), \
        "channel-first kernel mismatch vs reference"

    print("KERNEL_OK")
</pallas_src>

<mosaic_0001>
module attributes {stable_mosaic.version = 11 : i64} {
  func.func @_brdf_kernel(%arg0: i32, %arg1: memref<512x32xf32, #tpu.memory_space<vmem>>, %arg2: memref<64x32xf32, #tpu.memory_space<vmem>>, %arg3: memref<64x1xf32, #tpu.memory_space<vmem>>, %arg4: memref<12x64xf32, #tpu.memory_space<vmem>>, %arg5: memref<12x1xf32, #tpu.memory_space<vmem>>, %arg6: memref<12x512xf32, #tpu.memory_space<vmem>>) attributes {dimension_semantics = [#tpu.dimension_semantics<parallel>], iteration_bounds = array<i64: 4>, scalar_prefetch = 0 : i64, scratch_operands = 0 : i64, tpu.core_type = #tpu.core_type<tc>, window_params = [{transform_indices = @transform_0, window_bounds = array<i64: 512, 32>}, {pipeline_mode = #tpu.pipeline_mode<synchronous>, transform_indices = @transform_1, window_bounds = array<i64: 64, 32>}, {pipeline_mode = #tpu.pipeline_mode<synchronous>, transform_indices = @transform_2, window_bounds = array<i64: 64, 1>}, {pipeline_mode = #tpu.pipeline_mode<synchronous>, transform_indices = @transform_3, window_bounds = array<i64: 12, 64>}, {pipeline_mode = #tpu.pipeline_mode<synchronous>, transform_indices = @transform_4, window_bounds = array<i64: 12, 1>}, {transform_indices = @transform_5, window_bounds = array<i64: 12, 512>}]} {
    %c0 = arith.constant 0 : index
    %c0_0 = arith.constant 0 : index
    %0 = vector.load %arg1[%c0, %c0_0] : memref<512x32xf32, #tpu.memory_space<vmem>>, vector<512x32xf32>
    %c0_1 = arith.constant 0 : index
    %c0_2 = arith.constant 0 : index
    %1 = vector.load %arg2[%c0_1, %c0_2] : memref<64x32xf32, #tpu.memory_space<vmem>>, vector<64x32xf32>
    %cst = arith.constant dense<0.000000e+00> : vector<64x512xf32>
    %2 = tpu.matmul %1, %0, %cst {dimension_numbers = #tpu.dot_dimension_numbers<[1], [1], [0], [0], [0, 0, 1, 0], [], []>} : vector<64x32xf32>, vector<512x32xf32>, vector<64x512xf32> -> vector<64x512xf32>
    %c0_3 = arith.constant 0 : index
    %c0_4 = arith.constant 0 : index
    %3 = vector.load %arg3[%c0_3, %c0_4] : memref<64x1xf32, #tpu.memory_space<vmem>>, vector<64x1xf32>
    %4 = vector.broadcast %3 : vector<64x1xf32> to vector<64x512xf32>
    %5 = arith.addf %2, %4 : vector<64x512xf32>
    %cst_5 = arith.constant 0.000000e+00 : f32
    %6 = vector.broadcast %cst_5 : f32 to vector<64x512xf32>
    %7 = arith.maximumf %5, %6 : vector<64x512xf32>
    %c0_6 = arith.constant 0 : index
    %c0_7 = arith.constant 0 : index
    %8 = vector.load %arg4[%c0_6, %c0_7] : memref<12x64xf32, #tpu.memory_space<vmem>>, vector<12x64xf32>
    %cst_8 = arith.constant dense<0.000000e+00> : vector<12x512xf32>
    %9 = tpu.matmul %8, %7, %cst_8 {dimension_numbers = #tpu.dot_dimension_numbers<[1], [0], [0], [1], [0, 0, 1, 1], [], []>} : vector<12x64xf32>, vector<64x512xf32>, vector<12x512xf32> -> vector<12x512xf32>
    %c0_9 = arith.constant 0 : index
    %c0_10 = arith.constant 0 : index
    %10 = vector.load %arg5[%c0_9, %c0_10] : memref<12x1xf32, #tpu.memory_space<vmem>>, vector<12x1xf32>
    %11 = vector.broadcast %10 : vector<12x1xf32> to vector<12x512xf32>
    %12 = arith.addf %9, %11 : vector<12x512xf32>
    %13 = tpu.iota {dimensions = array<i32: 0>} : vector<12x512xi32>
    %cst_11 = arith.constant 0.000000e+00 : f32
    %14 = vector.broadcast %cst_11 : f32 to vector<12x512xf32>
    %15 = arith.maximumf %12, %14 : vector<12x512xf32>
    %16 = arith.negf %12 : vector<12x512xf32>
    %17 = math.exp %16 : vector<12x512xf32>
    %cst_12 = arith.constant 1.000000e+00 : f32
    %18 = vector.broadcast %cst_12 : f32 to vector<12x512xf32>
    %19 = arith.addf %18, %17 : vector<12x512xf32>
    %20 = arith.divf %18, %19 : vector<12x512xf32>
    %cst_13 = arith.constant 1.000000e+00 : f32
    %21 = vector.broadcast %cst_13 : f32 to vector<12x512xf32>
    %c3_i32 = arith.constant 3 : i32
    %22 = vector.broadcast %c3_i32 : i32 to vector<12x512xi32>
    %23 = arith.cmpi slt, %13, %22 : vector<12x512xi32>
    %c6_i32 = arith.constant 6 : i32
    %24 = vector.broadcast %c6_i32 : i32 to vector<12x512xi32>
    %25 = arith.cmpi slt, %13, %24 : vector<12x512xi32>
    %c9_i32 = arith.constant 9 : i32
    %26 = vector.broadcast %c9_i32 : i32 to vector<12x512xi32>
    %27 = arith.cmpi slt, %13, %26 : vector<12x512xi32>
    %28 = arith.select %27, %15, %21 : vector<12x512xi1>, vector<12x512xf32>
    %29 = arith.select %25, %20, %28 : vector<12x512xi1>, vector<12x512xf32>
    %30 = arith.select %23, %15, %29 : vector<12x512xi1>, vector<12x512xf32>
    %c0_14 = arith.constant 0 : index
    %c0_15 = arith.constant 0 : index
    %31 = vector.load %arg6[%c0_14, %c0_15] : memref<12x512xf32, #tpu.memory_space<vmem>>, vector<12x512xf32>
    tpu.vector_store %arg6[%c0_14, %c0_15], %30 {strides = array<i32>} : memref<12x512xf32, #tpu.memory_space<vmem>>, vector<12x512xf32>,
    return
  }
  func.func @transform_0(%arg0: i32) -> (i32, i32) {
    %c0_i32 = arith.constant 0 : i32
    %c0_i32_0 = arith.constant 0 : i32
    return %arg0, %c0_i32 : i32, i32
  }
  func.func @transform_1(%arg0: i32) -> (i32, i32) {
    %c0_i32 = arith.constant 0 : i32
    %c0_i32_0 = arith.constant 0 : i32
    %c0_i32_1 = arith.constant 0 : i32
    return %c0_i32, %c0_i32_0 : i32, i32
  }
  func.func @transform_2(%arg0: i32) -> (i32, i32) {
    %c0_i32 = arith.constant 0 : i32
    %c0_i32_0 = arith.constant 0 : i32
    %c0_i32_1 = arith.constant 0 : i32
    return %c0_i32, %c0_i32_0 : i32, i32
  }
  func.func @transform_3(%arg0: i32) -> (i32, i32) {
    %c0_i32 = arith.constant 0 : i32
    %c0_i32_0 = arith.constant 0 : i32
    %c0_i32_1 = arith.constant 0 : i32
    return %c0_i32, %c0_i32_0 : i32, i32
  }
  func.func @transform_4(%arg0: i32) -> (i32, i32) {
    %c0_i32 = arith.constant 0 : i32
    %c0_i32_0 = arith.constant 0 : i32
    %c0_i32_1 = arith.constant 0 : i32
    return %c0_i32, %c0_i32_0 : i32, i32
  }
  func.func @transform_5(%arg0: i32) -> (i32, i32) {
    %c0_i32 = arith.constant 0 : i32
    %c0_i32_0 = arith.constant 0 : i32
    return %c0_i32, %arg0 : i32, i32
  }
}

</mosaic_0001>

<llo_original>
// kernel: tpu_custom_call.1
$region0: #{tpu_custom_call.1}
  #allocation0 [shape = 'u32[]', space=smem, size = 0x4, offset = 0x4, fixed_abs, tag = 'smem constant byte address 0x4 - core index']
  #allocation1 [shape = 'u32[72,128]{1,0:T(1,128)}', space=vmem, size = 0x9000, scoped, tag = 'internal scratch']
  %s0 = inlined_call_operand.vmem [shape: f32[2000,32], index: 0, kind: input, shape index: {}]
  %s1 = inlined_call_operand.vmem [shape: f32[64,32], index: 1, kind: input, shape index: {}]
  %s2 = inlined_call_operand.vmem [shape: f32[64,1], index: 2, kind: input, shape index: {}]
  %s3 = inlined_call_operand.vmem [shape: f32[12,64], index: 3, kind: input, shape index: {}]
  %s4 = inlined_call_operand.vmem [shape: f32[12,1], index: 4, kind: input, shape index: {}]
  %s5 = inlined_call_operand.hbm [shape: f32[12,2000], index: 5, kind: output, shape index: {}]
  %s6 = sld [smem:[#allocation0]]
  $region53: #{tpu_custom_call.1} parent=0
    _
  %s8 = ssub.s32 1, %s6
  %s9 = scalar_select 0, %s8, %s6
  $region1: #{tpu_custom_call.1} parent=0
    #allocation2 [shape = 'u8[65536]{0}', space=vmem, size = 0x10000, scoped, tag = 'output window, operand 0']
    #allocation3 [shape = 's32[2]{0}', space=sflag, size = 0x8, scoped, tag = 'scoped memory for tpu_custom_call.1']
    %10 = vsyncpa [#allocation3], 0
    %s11 = scalar_lea.sflag [#allocation3], 1
    %12 = vsyncpa %s11, 0
    loop: start=0, step=1, limit=6
    $region2: #{tpu_custom_call.1} parent=1 // loop_pre_header
      _
    $region3: #{tpu_custom_call.1} parent=1 // loop_header
      %s14 = sphi 0, %s18
      %p15 = scmp.ge.s32.totalorder %s14, 6
      %s24 = sphi 0, %s26
      %s27 = sphi 0, %s24
      %s28 = sphi 0, %s27
      %s44 = sphi 0, %s28
      %s48 = sphi 0, %s48
      %s50 = sphi 0, %s48
      %s51 = sphi 0, %s50
      %s65 = sphi 0, %s51
      %s69 = sphi 0, %s69
      %s71 = sphi 0, %s69
      %s72 = sphi 0, %s71
      %s86 = sphi 0, %s72
      %s90 = sphi 0, %s90
      %s92 = sphi 0, %s90
      %s93 = sphi 0, %s92
      %s107 = sphi 0, %s93
      %s111 = sphi 0, %s111
      %s113 = sphi 0, %s111
      %s114 = sphi 0, %s113
      %s128 = sphi 0, %s114
      %s134 = sphi 0, %s136
      %s137 = sphi 0, %s134
      %s138 = sphi 0, %s137
      %s154 = sphi 0, %s138
    $region4: #{tpu_custom_call.1} parent=1 // loop_header_branch
      %17 = sbr.rel (%p15) target = $region8
    $region5: #{tpu_custom_call.1} parent=1 // loop_body
      %s19 = ssub.s32 %s14, 1
      %s20 = ssub.s32 %s14, 2
      %s21 = sadd.s32 %s14, 1
      %s22 = ssub.s32 %s14, %s21
      %p23 = scmp.eq.s32.totalorder %s22, 0
      %s25 = sadd.s32 %s24, 1
      %s26 = scalar_select %p23, %s24, %s25
      %p29 = pneg %p23
      %p30 = scmp.eq.s32.totalorder %s14, 3
      %p31 = por %p29, %p30
      %p32 = scmp.ne.s32.totalorder %s24, %s27
      %p33 = scmp.eq.s32.totalorder %s14, 0
      %p34 = por %p32, %p33
      %p35 = scmp.ne.s32.totalorder %s24, %s27
      %p36 = scmp.eq.s32.totalorder %s19, 3
      %p37 = por %p35, %p36
      %p38 = scmp.ne.s32.totalorder %s27, %s28
      %p39 = scmp.eq.s32.totalorder %s19, 0
      %p40 = por %p38, %p39
      %p41 = scmp.ne.s32.totalorder %s27, %s28
      %p42 = scmp.eq.s32.totalorder %s20, 3
      %p43 = por %p41, %p42
      %p45 = scmp.ne.s32.totalorder %s28, %s44
      %p46 = scmp.eq.s32.totalorder %s20, 0
      %p47 = por %p45, %p46
      %s49 = sadd.s32 %s48, 1
      %p52 = scmp.eq.s32.totalorder %s14, 3
      %p53 = scmp.ne.s32.totalorder %s48, %s50
      %p54 = scmp.eq.s32.totalorder %s14, 0
      %p55 = por %p53, %p54
      %p56 = scmp.ne.s32.totalorder %s48, %s50
      %p57 = scmp.eq.s32.totalorder %s19, 3
      %p58 = por %p56, %p57
      %p59 = scmp.ne.s32.totalorder %s50, %s51
      %p60 = scmp.eq.s32.totalorder %s19, 0
      %p61 = por %p59, %p60
      %p62 = scmp.ne.s32.totalorder %s50, %s51
      %p63 = scmp.eq.s32.totalorder %s20, 3
      %p64 = por %p62, %p63
      %p66 = scmp.ne.s32.totalorder %s51, %s65
      %p67 = scmp.eq.s32.totalorder %s20, 0
      %p68 = por %p66, %p67
      %s70 = sadd.s32 %s69, 1
      %p73 = scmp.eq.s32.totalorder %s14, 3
      %p74 = scmp.ne.s32.totalorder %s69, %s71
      %p75 = scmp.eq.s32.totalorder %s14, 0
      %p76 = por %p74, %p75
      %p77 = scmp.ne.s32.totalorder %s69, %s71
      %p78 = scmp.eq.s32.totalorder %s19, 3
      %p79 = por %p77, %p78
      %p80 = scmp.ne.s32.totalorder %s71, %s72
      %p81 = scmp.eq.s32.totalorder %s19, 0
      %p82 = por %p80, %p81
      %p83 = scmp.ne.s32.totalorder %s71, %s72
      %p84 = scmp.eq.s32.totalorder %s20, 3
      %p85 = por %p83, %p84
      %p87 = scmp.ne.s32.totalorder %s72, %s86
      %p88 = scmp.eq.s32.totalorder %s20, 0
      %p89 = por %p87, %p88
      %s91 = sadd.s32 %s90, 1
      %p94 = scmp.eq.s32.totalorder %s14, 3
      %p95 = scmp.ne.s32.totalorder %s90, %s92
      %p96 = scmp.eq.s32.totalorder %s14, 0
      %p97 = por %p95, %p96
      %p98 = scmp.ne.s32.totalorder %s90, %s92
      %p99 = scmp.eq.s32.totalorder %s19, 3
      %p100 = por %p98, %p99
      %p101 = scmp.ne.s32.totalorder %s92, %s93
      %p102 = scmp.eq.s32.totalorder %s19, 0
      %p103 = por %p101, %p102
      %p104 = scmp.ne.s32.totalorder %s92, %s93
      %p105 = scmp.eq.s32.totalorder %s20, 3
      %p106 = por %p104, %p105
      %p108 = scmp.ne.s32.totalorder %s93, %s107
      %p109 = scmp.eq.s32.totalorder %s20, 0
      %p110 = por %p108, %p109
      %s112 = sadd.s32 %s111, 1
      %p115 = scmp.eq.s32.totalorder %s14, 3
      %p116 = scmp.ne.s32.totalorder %s111, %s113
      %p117 = scmp.eq.s32.totalorder %s14, 0
      %p118 = por %p116, %p117
      %p119 = scmp.ne.s32.totalorder %s111, %s113
      %p120 = scmp.eq.s32.totalorder %s19, 3
      %p121 = por %p119, %p120
      %p122 = scmp.ne.s32.totalorder %s113, %s114
      %p123 = scmp.eq.s32.totalorder %s19, 0
      %p124 = por %p122, %p123
      %p125 = scmp.ne.s32.totalorder %s113, %s114
      %p126 = scmp.eq.s32.totalorder %s20, 3
      %p127 = por %p125, %p126
      %p129 = scmp.ne.s32.totalorder %s114, %s128
      %p130 = scmp.eq.s32.totalorder %s20, 0
      %p131 = por %p129, %p130
      %s132 = ssub.s32 %s14, %s21
      %p133 = scmp.eq.s32.totalorder %s132, 0
      %s135 = sadd.s32 %s134, 1
      %s136 = scalar_select %p133, %s134, %s135
      %p139 = pneg %p133
      %p140 = scmp.eq.s32.totalorder %s14, 3
      %p141 = por %p139, %p140
      %p142 = scmp.ne.s32.totalorder %s134, %s137
      %p143 = scmp.eq.s32.totalorder %s14, 0
      %p144 = por %p142, %p143
      %p145 = scmp.ne.s32.totalorder %s134, %s137
      %p146 = scmp.eq.s32.totalorder %s19, 3
      %p147 = por %p145, %p146
      %p148 = scmp.ne.s32.totalorder %s137, %s138
      %p149 = scmp.eq.s32.totalorder %s19, 0
      %p150 = por %p148, %p149
      %p151 = scmp.ne.s32.totalorder %s137, %s138
      %p152 = scmp.eq.s32.totalorder %s20, 3
      %p153 = por %p151, %p152
      %p155 = scmp.ne.s32.totalorder %s138, %s154
      %p156 = scmp.eq.s32.totalorder %s20, 0
      %p157 = por %p155, %p156
      %p158 = scmp.le.s32.totalorder 1, %s14
      %p159 = scmp.lt.s32.totalorder %s14, 5
      %p160 = pnand %p158, %p159
      %p161 = pneg %p160
      // Predicated region
      $region9: #{tpu_custom_call.1} parent=5 // pred_check
        _
      $region10: #{tpu_custom_call.1} parent=5 // pred_check_branch
        %163 = sbr.rel (%p160) target = $region12
      $region11: #{tpu_custom_call.1} parent=5 // pred_region
        %s164 = ssub.s32 %s14, 1
        // Predicated region
        $region13: #{tpu_custom_call.1} parent=11 // pred_check
          %p165 = pneg %p61
        $region14: #{tpu_custom_call.1} parent=11 // pred_check_branch
          %167 = sbr.rel (%p165) target = $region16
        $region15: #{tpu_custom_call.1} parent=11 // pred_region
          _
        $region16: #{tpu_custom_call.1} parent=11 // pred_fallthru
          _
        // Predicated region
        $region17: #{tpu_custom_call.1} parent=11 // pred_check
          %p168 = pneg %p82
        $region18: #{tpu_custom_call.1} parent=11 // pred_check_branch
          %170 = sbr.rel (%p168) target = $region20
        $region19: #{tpu_custom_call.1} parent=11 // pred_region
          _
        $region20: #{tpu_custom_call.1} parent=11 // pred_fallthru
          _
        // Predicated region
        $region21: #{tpu_custom_call.1} parent=11 // pred_check
          %p171 = pneg %p103
        $region22: #{tpu_custom_call.1} parent=11 // pred_check_branch
          %173 = sbr.rel (%p171) target = $region24
        $region23: #{tpu_custom_call.1} parent=11 // pred_region
          _
        $region24: #{tpu_custom_call.1} parent=11 // pred_fallthru
          _
        // Predicated region
        $region25: #{tpu_custom_call.1} parent=11 // pred_check
          %p174 = pneg %p124
        $region26: #{tpu_custom_call.1} parent=11 // pred_check_branch
          %176 = sbr.rel (%p174) target = $region28
        $region27: #{tpu_custom_call.1} parent=11 // pred_region
          _
        $region28: #{tpu_custom_call.1} parent=11 // pred_fallthru
          _
      $region12: #{tpu_custom_call.1} parent=5 // pred_fallthru
        _
      %p177 = scmp.lt.s32.totalorder %s14, 4
      // Predicated region
      $region29: #{tpu_custom_call.1} parent=5 // pred_check
        %p178 = pneg %p177
      $region30: #{tpu_custom_call.1} parent=5 // pred_check_branch
        %180 = sbr.rel (%p178) target = $region32
      $region31: #{tpu_custom_call.1} parent=5 // pred_region
        // Predicated region
        $region33: #{tpu_custom_call.1} parent=31 // pred_check
          %p181 = pneg %p34
        $region34: #{tpu_custom_call.1} parent=31 // pred_check_branch
          %183 = sbr.rel (%p181) target = $region36
        $region35: #{tpu_custom_call.1} parent=31 // pred_region
          %s184 = smul.u32 64, %s14
          %s185 = ssub.s32 250, %s184
          %p186 = scmp.lt.s32.totalorder %s185, 64
          %s187 = scalar_select %p186, %s185, 64
          %s188 = smul.u32 8, %s187
          %p189 = scmp.lt.s32.totalorder %s184, 249
          %s190 = scalar_select %p189, %s184, 249
          %s191 = smul.addr %s190, 8
          %s192 = scalar_lea.vmem %s0, %s191
          %s193 = smul.u32 64, %s14
          %s194 = ssub.s32 250, %s193
          %p195 = scmp.lt.s32.totalorder %s194, 64
          %s196 = scalar_select %p195, %s194, 64
          %s197 = smul.u32 8, %s196
        $region36: #{tpu_custom_call.1} parent=31 // pred_fallthru
          _
      $region32: #{tpu_custom_call.1} parent=5 // pred_fallthru
        _
      %p198 = scmp.le.s32.totalorder 1, %s14
      %p199 = scmp.lt.s32.totalorder %s14, 5
      %p200 = pnand %p198, %p199
      %p201 = pneg %p200
      // Predicated region
      $region37: #{tpu_custom_call.1} parent=5 // pred_check
        _
      $region38: #{tpu_custom_call.1} parent=5 // pred_check_branch
        %203 = sbr.rel (%p200) target = $region40
      $region39: #{tpu_custom_call.1} parent=5 // pred_region
        %s204 = ssub.s32 %s14, 1
        %s205 = smul.u32 64, %s19
        %s206 = ssub.s32 250, %s205
        %p207 = scmp.lt.s32.totalorder %s206, 64
        %s208 = scalar_select %p207, %s206, 64
        %s209 = smul.u32 8, %s208
        %p210 = scmp.lt.s32.totalorder %s205, 249
        %s211 = scalar_select %p210, %s205, 249
        %s212 = smul.addr %s211, 8
        %s213 = scalar_lea.vmem %s0, %s212
        %p214 = pneg %p40
        %p215 = pneg %p37
        %p216 = pneg %p61
        %p217 = pneg %p58
        %p218 = pneg %p82
        %p219 = pneg %p79
        %p220 = pneg %p103
        %p221 = pneg %p100
        %p222 = pneg %p124
        %p223 = pneg %p121
        %p224 = pneg %p150
        %p225 = pneg %p147
        %s226 = sand.u32 %s137, 1
        %s227 = scalar_lea.sflag [#allocation3], %s226
        %s228 = sand.u32 %s137, 1
        %s229 = smul.addr %s228, 64
        %s230 = scalar_lea.vmem [#allocation2], %s229
        %s231 = smul.u32 64, %s19
        %s232 = ssub.s32 250, %s231
        %p233 = scmp.lt.s32.totalorder %s232, 64
        %s234 = scalar_select %p233, %s232, 64
        %s235 = smul.u32 8, %s234
        %p236 = scmp.lt.s32.totalorder %s231, 249
        %s237 = scalar_select %p236, %s231, 249
        %s238 = smul.addr %s237, 8
        %s239 = scalar_lea.vmem %s0, %s238
        %s240 = smul.u32 64, %s19
        %s241 = ssub.s32 250, %s240
        %p242 = scmp.lt.s32.totalorder %s241, 64
        %s243 = scalar_select %p242, %s241, 64
        %s244 = smul.u32 8, %s243
        %s245 = smul.u32 4, %s19
        %v246 = vld [vmem:[%s239] sm:$0xff]
        %v247 = vld [vmem:[%s239 + $0x8] sm:$0xff]
        %v248 = vld [vmem:[%s239 + $0x10] sm:$0xff]
        %v249 = vld [vmem:[%s239 + $0x18] sm:$0xff]
        %v250 = vld [vmem:[%s239 + $0x20] sm:$0xff]
        %v251 = vld [vmem:[%s239 + $0x28] sm:$0xff]
        %v252 = vld [vmem:[%s239 + $0x30] sm:$0xff]
        %v253 = vld [vmem:[%s239 + $0x38] sm:$0xff]
        %v254 = vld [vmem:[%s239 + $0x40] sm:$0xff]
        %v255 = vld [vmem:[%s239 + $0x48] sm:$0xff]
        %v256 = vld [vmem:[%s239 + $0x50] sm:$0xff]
        %v257 = vld [vmem:[%s239 + $0x58] sm:$0xff]
        %v258 = vld [vmem:[%s239 + $0x60] sm:$0xff]
        %v259 = vld [vmem:[%s239 + $0x68] sm:$0xff]
        %v260 = vld [vmem:[%s239 + $0x70] sm:$0xff]
        %v261 = vld [vmem:[%s239 + $0x78] sm:$0xff]
        %v262 = vld [vmem:[%s239 + $0x80] sm:$0xff]
        %v263 = vld [vmem:[%s239 + $0x88] sm:$0xff]
        %v264 = vld [vmem:[%s239 + $0x90] sm:$0xff]
        %v265 = vld [vmem:[%s239 + $0x98] sm:$0xff]
        %v266 = vld [vmem:[%s239 + $0xa0] sm:$0xff]
        %v267 = vld [vmem:[%s239 + $0xa8] sm:$0xff]
        %v268 = vld [vmem:[%s239 + $0xb0] sm:$0xff]
        %v269 = vld [vmem:[%s239 + $0xb8] sm:$0xff]
        %v270 = vld [vmem:[%s239 + $0xc0] sm:$0xff]
        %v271 = vld [vmem:[%s239 + $0xc8] sm:$0xff]
        %v272 = vld [vmem:[%s239 + $0xd0] sm:$0xff]
        %v273 = vld [vmem:[%s239 + $0xd8] sm:$0xff]
        %v274 = vld [vmem:[%s239 + $0xe0] sm:$0xff]
        %v275 = vld [vmem:[%s239 + $0xe8] sm:$0xff]
        %v276 = vld [vmem:[%s239 + $0xf0] sm:$0xff]
        %v277 = vld [vmem:[%s239 + $0xf8] sm:$0xff]
        %v278 = vld [vmem:[%s239 + $0x100] sm:$0xff]
        %v279 = vld [vmem:[%s239 + $0x108] sm:$0xff]
        %v280 = vld [vmem:[%s239 + $0x110] sm:$0xff]
        %v281 = vld [vmem:[%s239 + $0x118] sm:$0xff]
        %v282 = vld [vmem:[%s239 + $0x120] sm:$0xff]
        %v283 = vld [vmem:[%s239 + $0x128] sm:$0xff]
        %v284 = vld [vmem:[%s239 + $0x130] sm:$0xff]
        %v285 = vld [vmem:[%s239 + $0x138] sm:$0xff]
        %v286 = vld [vmem:[%s239 + $0x140] sm:$0xff]
        %v287 = vld [vmem:[%s239 + $0x148] sm:$0xff]
        %v288 = vld [vmem:[%s239 + $0x150] sm:$0xff]
        %v289 = vld [vmem:[%s239 + $0x158] sm:$0xff]
        %v290 = vld [vmem:[%s239 + $0x160] sm:$0xff]
        %v291 = vld [vmem:[%s239 + $0x168] sm:$0xff]
        %v292 = vld [vmem:[%s239 + $0x170] sm:$0xff]
        %v293 = vld [vmem:[%s239 + $0x178] sm:$0xff]
        %v294 = vld [vmem:[%s239 + $0x180] sm:$0xff]
        %v295 = vld [vmem:[%s239 + $0x188] sm:$0xff]
        %v296 = vld [vmem:[%s239 + $0x190] sm:$0xff]
        %v297 = vld [vmem:[%s239 + $0x198] sm:$0xff]
        %v298 = vld [vmem:[%s239 + $0x1a0] sm:$0xff]
        %v299 = vld [vmem:[%s239 + $0x1a8] sm:$0xff]
        %v300 = vld [vmem:[%s239 + $0x1b0] sm:$0xff]
        %v301 = vld [vmem:[%s239 + $0x1b8] sm:$0xff]
        %v302 = vld [vmem:[%s239 + $0x1c0] sm:$0xff]
        %v303 = vld [vmem:[%s239 + $0x1c8] sm:$0xff]
        %v304 = vld [vmem:[%s239 + $0x1d0] sm:$0xff]
        %v305 = vld [vmem:[%s239 + $0x1d8] sm:$0xff]
        %v306 = vld [vmem:[%s239 + $0x1e0] sm:$0xff]
        %v307 = vld [vmem:[%s239 + $0x1e8] sm:$0xff]
        %v308 = vld [vmem:[%s239 + $0x1f0] sm:$0xff]
        %v309 = vld [vmem:[%s239 + $0x1f8] sm:$0xff]
        %v310 = vld [vmem:[%s1] sm:$0xff]
        %v311 = vld [vmem:[%s1 + $0x8] sm:$0xff]
        %v312 = vld [vmem:[%s1 + $0x10] sm:$0xff]
        %v313 = vld [vmem:[%s1 + $0x18] sm:$0xff]
        %v314 = vld [vmem:[%s1 + $0x20] sm:$0xff]
        %v315 = vld [vmem:[%s1 + $0x28] sm:$0xff]
        %v316 = vld [vmem:[%s1 + $0x30] sm:$0xff]
        %v317 = vld [vmem:[%s1 + $0x38] sm:$0xff]
        %v318 = vld [vmem:[%s2] sm:$0xff]
        %v319 = vld [vmem:[%s2 + $0x8] sm:$0xff]
        %v320 = vld [vmem:[%s2 + $0x10] sm:$0xff]
        %v321 = vld [vmem:[%s2 + $0x18] sm:$0xff]
        %v322 = vld [vmem:[%s2 + $0x20] sm:$0xff]
        %v323 = vld [vmem:[%s2 + $0x28] sm:$0xff]
        %v324 = vld [vmem:[%s2 + $0x30] sm:$0xff]
        %v325 = vld [vmem:[%s2 + $0x38] sm:$0xff]
        %327 = vset.pattern.permute.xlu0 0
        %328 = vperm.xlu0 %327, %v318
        %v329 = vpop.permute.xlu0 %328
        %332 = vset.pattern.permute.xlu0 0
        %333 = vperm.xlu0 %332, %v319
        %v334 = vpop.permute.xlu0 %333
        %337 = vset.pattern.permute.xlu0 0
        %338 = vperm.xlu0 %337, %v320
        %v339 = vpop.permute.xlu0 %338
        %342 = vset.pattern.permute.xlu0 0
        %343 = vperm.xlu0 %342, %v321
        %v344 = vpop.permute.xlu0 %343
        %347 = vset.pattern.permute.xlu0 0
        %348 = vperm.xlu0 %347, %v322
        %v349 = vpop.permute.xlu0 %348
        %352 = vset.pattern.permute.xlu0 0
        %353 = vperm.xlu0 %352, %v323
        %v354 = vpop.permute.xlu0 %353
        %357 = vset.pattern.permute.xlu0 0
        %358 = vperm.xlu0 %357, %v324
        %v359 = vpop.permute.xlu0 %358
        %362 = vset.pattern.permute.xlu0 0
        %363 = vperm.xlu0 %362, %v325
        %v364 = vpop.permute.xlu0 %363
        %vm366 = vcmask 261120
        %v368 = vsel %vm366, %v310, 0
        %v371 = vsel %vm366, %v311, 0
        %v374 = vsel %vm366, %v312, 0
        %v377 = vsel %vm366, %v313, 0
        %v380 = vsel %vm366, %v314, 0
        %v383 = vsel %vm366, %v315, 0
        %v386 = vsel %vm366, %v316, 0
        %v389 = vsel %vm366, %v317, 0
        %v392 = vsel %vm366, %v246, 0
        %v395 = vsel %vm366, %v247, 0
        %v398 = vsel %vm366, %v248, 0
        %v401 = vsel %vm366, %v249, 0
        %v404 = vsel %vm366, %v250, 0
        %v407 = vsel %vm366, %v251, 0
        %v410 = vsel %vm366, %v252, 0
        %v413 = vsel %vm366, %v253, 0
        %v416 = vsel %vm366, %v254, 0
        %v419 = vsel %vm366, %v255, 0
        %v422 = vsel %vm366, %v256, 0
        %v425 = vsel %vm366, %v257, 0
        %v428 = vsel %vm366, %v258, 0
        %v431 = vsel %vm366, %v259, 0
        %v434 = vsel %vm366, %v260, 0
        %v437 = vsel %vm366, %v261, 0
        %v440 = vsel %vm366, %v262, 0
        %v443 = vsel %vm366, %v263, 0
        %v446 = vsel %vm366, %v264, 0
        %v449 = vsel %vm366, %v265, 0
        %v452 = vsel %vm366, %v266, 0
        %v455 = vsel %vm366, %v267, 0
        %v458 = vsel %vm366, %v268, 0
        %v461 = vsel %vm366, %v269, 0
        %v464 = vsel %vm366, %v270, 0
        %v467 = vsel %vm366, %v271, 0
        %v470 = vsel %vm366, %v272, 0
        %v473 = vsel %vm366, %v273, 0
        %v476 = vsel %vm366, %v274, 0
        %v479 = vsel %vm366, %v275, 0
        %v482 = vsel %vm366, %v276, 0
        %v485 = vsel %vm366, %v277, 0
        %v488 = vsel %vm366, %v278, 0
        %v491 = vsel %vm366, %v279, 0
        %v494 = vsel %vm366, %v280, 0
        %v497 = vsel %vm366, %v281, 0
        %v500 = vsel %vm366, %v282, 0
        %v503 = vsel %vm366, %v283, 0
        %v506 = vsel %vm366, %v284, 0
        %v509 = vsel %vm366, %v285, 0
        %v512 = vsel %vm366, %v286, 0
        %v515 = vsel %vm366, %v287, 0
        %v518 = vsel %vm366, %v288, 0
        %v521 = vsel %vm366, %v289, 0
        %v524 = vsel %vm366, %v290, 0
        %v527 = vsel %vm366, %v291, 0
        %v530 = vsel %vm366, %v292, 0
        %v533 = vsel %vm366, %v293, 0
        %v536 = vsel %vm366, %v294, 0
        %v539 = vsel %vm366, %v295, 0
        %v542 = vsel %vm366, %v296, 0
        %v545 = vsel %vm366, %v297, 0
        %v548 = vsel %vm366, %v298, 0
        %v551 = vsel %vm366, %v299, 0
        %v554 = vsel %vm366, %v300, 0
        %v557 = vsel %vm366, %v301, 0
        %v560 = vsel %vm366, %v302, 0
        %v563 = vsel %vm366, %v303, 0
        %v566 = vsel %vm366, %v304, 0
        %v569 = vsel %vm366, %v305, 0
        %v572 = vsel %vm366, %v306, 0
        %v575 = vsel %vm366, %v307, 0
        %v578 = vsel %vm366, %v308, 0
        %v581 = vsel %vm366, %v309, 0
        %583 = vmatpush.xpose.msra.mxu0 %v437
        %584 = vmatpush.xpose.msra.mxu0 %v434
        %585 = vmatpush.xpose.msra.mxu0 %v431
        %586 = vmatpush.xpose.msra.mxu0 %v428
        %587 = vmatpush.xpose.msra.mxu0 %v425
        %588 = vmatpush.xpose.msra.mxu0 %v422
        %589 = vmatpush.xpose.msra.mxu0 %v419
        %590 = vmatpush.xpose.msra.mxu0 %v416
        %591 = vmatpush.xpose.msra.mxu0 %v413
        %592 = vmatpush.xpose.msra.mxu0 %v410
        %593 = vmatpush.xpose.msra.mxu0 %v407
        %594 = vmatpush.xpose.msra.mxu0 %v404
        %595 = vmatpush.xpose.msra.mxu0 %v401
        %596 = vmatpush.xpose.msra.mxu0 %v398
        %597 = vmatpush.xpose.msra.mxu0 %v395
        %598 = vmatpush.xpose.msra.mxu0 %v392
        %599 = vmatmul.f32.gmra.mxu0 %v368
        %v600 = vpop.f32.mrf.mxu0
        %v601 = vadd.f32 %v329, %v600
        %602 = vmatmul.f32.gmra.mxu0 %v371
        %v603 = vpop.f32.mrf.mxu0
        %v604 = vadd.f32 %v334, %v603
        %605 = vmatmul.f32.gmra.mxu0 %v374
        %v606 = vpop.f32.mrf.mxu0
        %v607 = vadd.f32 %v339, %v606
        %608 = vmatmul.f32.gmra.mxu0 %v377
        %v609 = vpop.f32.mrf.mxu0
        %v610 = vadd.f32 %v344, %v609
        %611 = vmatmul.f32.gmra.mxu0 %v380
        %v612 = vpop.f32.mrf.mxu0
        %v613 = vadd.f32 %v349, %v612
        %614 = vmatmul.f32.gmra.mxu0 %v383
        %v615 = vpop.f32.mrf.mxu0
        %v616 = vadd.f32 %v354, %v615
        %617 = vmatmul.f32.gmra.mxu0 %v386
        %v618 = vpop.f32.mrf.mxu0
        %v619 = vadd.f32 %v359, %v618
        %620 = vmatmul.f32.gmra.mxu0 %v389
        %v621 = vpop.f32.mrf.mxu0
        %v622 = vadd.f32 %v364, %v621
        %623 = vdwg.mxu0
        %624 = vmatpush.xpose.msra.mxu0 %v485
        %625 = vmatpush.xpose.msra.mxu0 %v482
        %626 = vmatpush.xpose.msra.mxu0 %v479
        %627 = vmatpush.xpose.msra.mxu0 %v476
        %628 = vmatpush.xpose.msra.mxu0 %v473
        %629 = vmatpush.xpose.msra.mxu0 %v470
        %630 = vmatpush.xpose.msra.mxu0 %v467
        %631 = vmatpush.xpose.msra.mxu0 %v464
        %632 = vmatpush.xpose.msra.mxu0 %v461
        %633 = vmatpush.xpose.msra.mxu0 %v458
        %634 = vmatpush.xpose.msra.mxu0 %v455
        %635 = vmatpush.xpose.msra.mxu0 %v452
        %636 = vmatpush.xpose.msra.mxu0 %v449
        %637 = vmatpush.xpose.msra.mxu0 %v446
        %638 = vmatpush.xpose.msra.mxu0 %v443
        %639 = vmatpush.xpose.msra.mxu0 %v440
        %640 = vmatmul.f32.gmra.mxu0 %v368
        %v641 = vpop.f32.mrf.mxu0
        %v642 = vadd.f32 %v329, %v641
        %643 = vmatmul.f32.gmra.mxu0 %v371
        %v644 = vpop.f32.mrf.mxu0
        %v645 = vadd.f32 %v334, %v644
        %646 = vmatmul.f32.gmra.mxu0 %v374
        %v647 = vpop.f32.mrf.mxu0
        %v648 = vadd.f32 %v339, %v647
        %649 = vmatmul.f32.gmra.mxu0 %v377
        %v650 = vpop.f32.mrf.mxu0
        %v651 = vadd.f32 %v344, %v650
        %652 = vmatmul.f32.gmra.mxu0 %v380
        %v653 = vpop.f32.mrf.mxu0
        %v654 = vadd.f32 %v349, %v653
        %655 = vmatmul.f32.gmra.mxu0 %v383
        %v656 = vpop.f32.mrf.mxu0
        %v657 = vadd.f32 %v354, %v656
        %658 = vmatmul.f32.gmra.mxu0 %v386
        %v659 = vpop.f32.mrf.mxu0
        %v660 = vadd.f32 %v359, %v659
        %661 = vmatmul.f32.gmra.mxu0 %v389
        %v662 = vpop.f32.mrf.mxu0
        %v663 = vadd.f32 %v364, %v662
        %664 = vdwg.mxu0
        %665 = vmatpush.xpose.msra.mxu0 %v533
        %666 = vmatpush.xpose.msra.mxu0 %v530
        %667 = vmatpush.xpose.msra.mxu0 %v527
        %668 = vmatpush.xpose.msra.mxu0 %v524
        %669 = vmatpush.xpose.msra.mxu0 %v521
        %670 = vmatpush.xpose.msra.mxu0 %v518
        %671 = vmatpush.xpose.msra.mxu0 %v515
        %672 = vmatpush.xpose.msra.mxu0 %v512
        %673 = vmatpush.xpose.msra.mxu0 %v509
        %674 = vmatpush.xpose.msra.mxu0 %v506
        %675 = vmatpush.xpose.msra.mxu0 %v503
        %676 = vmatpush.xpose.msra.mxu0 %v500
        %677 = vmatpush.xpose.msra.mxu0 %v497
        %678 = vmatpush.xpose.msra.mxu0 %v494
        %679 = vmatpush.xpose.msra.mxu0 %v491
        %680 = vmatpush.xpose.msra.mxu0 %v488
        %681 = vmatmul.f32.gmra.mxu0 %v368
        %v682 = vpop.f32.mrf.mxu0
        %v683 = vadd.f32 %v329, %v682
        %684 = vmatmul.f32.gmra.mxu0 %v371
        %v685 = vpop.f32.mrf.mxu0
        %v686 = vadd.f32 %v334, %v685
        %687 = vmatmul.f32.gmra.mxu0 %v374
        %v688 = vpop.f32.mrf.mxu0
        %v689 = vadd.f32 %v339, %v688
        %690 = vmatmul.f32.gmra.mxu0 %v377
        %v691 = vpop.f32.mrf.mxu0
        %v692 = vadd.f32 %v344, %v691
        %693 = vmatmul.f32.gmra.mxu0 %v380
        %v694 = vpop.f32.mrf.mxu0
        %v695 = vadd.f32 %v349, %v694
        %696 = vmatmul.f32.gmra.mxu0 %v383
        %v697 = vpop.f32.mrf.mxu0
        %v698 = vadd.f32 %v354, %v697
        %699 = vmatmul.f32.gmra.mxu0 %v386
        %v700 = vpop.f32.mrf.mxu0
        %v701 = vadd.f32 %v359, %v700
        %702 = vmatmul.f32.gmra.mxu0 %v389
        %v703 = vpop.f32.mrf.mxu0
        %v704 = vadd.f32 %v364, %v703
        %705 = vdwg.mxu0
        %706 = vmatpush.xpose.msra.mxu0 %v581
        %707 = vmatpush.xpose.msra.mxu0 %v578
        %708 = vmatpush.xpose.msra.mxu0 %v575
        %709 = vmatpush.xpose.msra.mxu0 %v572
        %710 = vmatpush.xpose.msra.mxu0 %v569
        %711 = vmatpush.xpose.msra.mxu0 %v566
        %712 = vmatpush.xpose.msra.mxu0 %v563
        %713 = vmatpush.xpose.msra.mxu0 %v560
        %714 = vmatpush.xpose.msra.mxu0 %v557
        %715 = vmatpush.xpose.msra.mxu0 %v554
        %716 = vmatpush.xpose.msra.mxu0 %v551
        %717 = vmatpush.xpose.msra.mxu0 %v548
        %718 = vmatpush.xpose.msra.mxu0 %v545
        %719 = vmatpush.xpose.msra.mxu0 %v542
        %720 = vmatpush.xpose.msra.mxu0 %v539
        %721 = vmatpush.xpose.msra.mxu0 %v536
        %722 = vmatmul.f32.gmra.mxu0 %v368
        %v723 = vpop.f32.mrf.mxu0
        %v724 = vadd.f32 %v329, %v723
        %725 = vmatmul.f32.gmra.mxu0 %v371
        %v726 = vpop.f32.mrf.mxu0
        %v727 = vadd.f32 %v334, %v726
        %728 = vmatmul.f32.gmra.mxu0 %v374
        %v729 = vpop.f32.mrf.mxu0
        %v730 = vadd.f32 %v339, %v729
        %731 = vmatmul.f32.gmra.mxu0 %v377
        %v732 = vpop.f32.mrf.mxu0
        %v733 = vadd.f32 %v344, %v732
        %734 = vmatmul.f32.gmra.mxu0 %v380
        %v735 = vpop.f32.mrf.mxu0
        %v736 = vadd.f32 %v349, %v735
        %737 = vmatmul.f32.gmra.mxu0 %v383
        %v738 = vpop.f32.mrf.mxu0
        %v739 = vadd.f32 %v354, %v738
        %740 = vmatmul.f32.gmra.mxu0 %v386
        %v741 = vpop.f32.mrf.mxu0
        %v742 = vadd.f32 %v359, %v741
        %743 = vmatmul.f32.gmra.mxu0 %v389
        %v744 = vpop.f32.mrf.mxu0
        %v745 = vadd.f32 %v364, %v744
        %746 = vdwg.mxu0
        %v747 = vmax.f32 %v601, 0.0
        %v748 = vmax.f32 %v642, 0.0
        %v749 = vmax.f32 %v683, 0.0
        %v750 = vmax.f32 %v724, 0.0
        %v751 = vmax.f32 %v604, 0.0
        %v752 = vmax.f32 %v645, 0.0
        %v753 = vmax.f32 %v686, 0.0
        %v754 = vmax.f32 %v727, 0.0
        %v755 = vmax.f32 %v607, 0.0
        %v756 = vmax.f32 %v648, 0.0
        %v757 = vmax.f32 %v689, 0.0
        %v758 = vmax.f32 %v730, 0.0
        %v759 = vmax.f32 %v610, 0.0
        %v760 = vmax.f32 %v651, 0.0
        %v761 = vmax.f32 %v692, 0.0
        %v762 = vmax.f32 %v733, 0.0
        %v763 = vmax.f32 %v613, 0.0
        %v764 = vmax.f32 %v654, 0.0
        %v765 = vmax.f32 %v695, 0.0
        %v766 = vmax.f32 %v736, 0.0
        %v767 = vmax.f32 %v616, 0.0
        %v768 = vmax.f32 %v657, 0.0
        %v769 = vmax.f32 %v698, 0.0
        %v770 = vmax.f32 %v739, 0.0
        %v771 = vmax.f32 %v619, 0.0
        %v772 = vmax.f32 %v660, 0.0
        %v773 = vmax.f32 %v701, 0.0
        %v774 = vmax.f32 %v742, 0.0
        %v775 = vmax.f32 %v622, 0.0
        %v776 = vmax.f32 %v663, 0.0
        %v777 = vmax.f32 %v704, 0.0
        %v778 = vmax.f32 %v745, 0.0
        %v779 = vld [vmem:[%s3] sm:$0xff]
        %v780 = vld [vmem:[%s3 + $0x8] sm:$0xf]
        %v781 = vld [vmem:[%s4] sm:$0xff]
        %v782 = vld [vmem:[%s4 + $0x8] sm:$0xf]
        %784 = vset.pattern.permute.xlu0 0
        %785 = vperm.xlu0 %784, %v781
        %v786 = vpop.permute.xlu0 %785
        %789 = vset.pattern.permute.xlu0 0
        %790 = vperm.xlu0 %789, %v782
        %v791 = vpop.permute.xlu0 %790
        %vm793 = vcmask 523264
        %v795 = vsel %vm793, %v779, 0
        %v798 = vsel %vm793, %v780, 0
        %800 = vmatpush.msra.mxu0 0.0
        %801 = vmatpush.msra.mxu0 0.0
        %802 = vmatpush.msra.mxu0 0.0
        %803 = vmatpush.msra.mxu0 0.0
        %804 = vmatpush.msra.mxu0 0.0
        %805 = vmatpush.msra.mxu0 0.0
        %806 = vmatpush.msra.mxu0 0.0
        %807 = vmatpush.msra.mxu0 0.0
        %808 = vmatpush.msra.mxu0 %v775
        %809 = vmatpush.msra.mxu0 %v771
        %810 = vmatpush.msra.mxu0 %v767
        %811 = vmatpush.msra.mxu0 %v763
        %812 = vmatpush.msra.mxu0 %v759
        %813 = vmatpush.msra.mxu0 %v755
        %814 = vmatpush.msra.mxu0 %v751
        %815 = vmatpush.msra.mxu0 %v747
        %816 = vmatmul.f32.gmra.mxu0 %v795
        %v817 = vpop.f32.mrf.mxu0
        %v818 = vadd.f32 %v786, %v817
        %819 = vmatmul.f32.gmra.mxu0 %v798
        %v820 = vpop.f32.mrf.mxu0
        %v821 = vadd.f32 %v791, %v820
        %822 = vdwg.mxu0
        %823 = vmatpush.msra.mxu0 0.0
        %824 = vmatpush.msra.mxu0 0.0
        %825 = vmatpush.msra.mxu0 0.0
        %826 = vmatpush.msra.mxu0 0.0
        %827 = vmatpush.msra.mxu0 0.0
        %828 = vmatpush.msra.mxu0 0.0
        %829 = vmatpush.msra.mxu0 0.0
        %830 = vmatpush.msra.mxu0 0.0
        %831 = vmatpush.msra.mxu0 %v776
        %832 = vmatpush.msra.mxu0 %v772
        %833 = vmatpush.msra.mxu0 %v768
        %834 = vmatpush.msra.mxu0 %v764
        %835 = vmatpush.msra.mxu0 %v760
        %836 = vmatpush.msra.mxu0 %v756
        %837 = vmatpush.msra.mxu0 %v752
        %838 = vmatpush.msra.mxu0 %v748
        %839 = vmatmul.f32.gmra.mxu0 %v795
        %v840 = vpop.f32.mrf.mxu0
        %v841 = vadd.f32 %v786, %v840
        %842 = vmatmul.f32.gmra.mxu0 %v798
        %v843 = vpop.f32.mrf.mxu0
        %v844 = vadd.f32 %v791, %v843
        %845 = vdwg.mxu0
        %846 = vmatpush.msra.mxu0 0.0
        %847 = vmatpush.msra.mxu0 0.0
        %848 = vmatpush.msra.mxu0 0.0
        %849 = vmatpush.msra.mxu0 0.0
        %850 = vmatpush.msra.mxu0 0.0
        %851 = vmatpush.msra.mxu0 0.0
        %852 = vmatpush.msra.mxu0 0.0
        %853 = vmatpush.msra.mxu0 0.0
        %854 = vmatpush.msra.mxu0 %v777
        %855 = vmatpush.msra.mxu0 %v773
        %856 = vmatpush.msra.mxu0 %v769
        %857 = vmatpush.msra.mxu0 %v765
        %858 = vmatpush.msra.mxu0 %v761
        %859 = vmatpush.msra.mxu0 %v757
        %860 = vmatpush.msra.mxu0 %v753
        %861 = vmatpush.msra.mxu0 %v749
        %862 = vmatmul.f32.gmra.mxu0 %v795
        %v863 = vpop.f32.mrf.mxu0
        %v864 = vadd.f32 %v786, %v863
        %865 = vmatmul.f32.gmra.mxu0 %v798
        %v866 = vpop.f32.mrf.mxu0
        %v867 = vadd.f32 %v791, %v866
        %868 = vdwg.mxu0
        %869 = vmatpush.msra.mxu0 0.0
        %870 = vmatpush.msra.mxu0 0.0
        %871 = vmatpush.msra.mxu0 0.0
        %872 = vmatpush.msra.mxu0 0.0
        %873 = vmatpush.msra.mxu0 0.0
        %874 = vmatpush.msra.mxu0 0.0
        %875 = vmatpush.msra.mxu0 0.0
        %876 = vmatpush.msra.mxu0 0.0
        %877 = vmatpush.msra.mxu0 %v778
        %878 = vmatpush.msra.mxu0 %v774
        %879 = vmatpush.msra.mxu0 %v770
        %880 = vmatpush.msra.mxu0 %v766
        %881 = vmatpush.msra.mxu0 %v762
        %882 = vmatpush.msra.mxu0 %v758
        %883 = vmatpush.msra.mxu0 %v754
        %884 = vmatpush.msra.mxu0 %v750
        %885 = vmatmul.f32.gmra.mxu0 %v795
        %v886 = vpop.f32.mrf.mxu0
        %v887 = vadd.f32 %v786, %v886
        %888 = vmatmul.f32.gmra.mxu0 %v798
        %v889 = vpop.f32.mrf.mxu0
        %v890 = vadd.f32 %v791, %v889
        %891 = vdwg.mxu0
        %v892 = vlaneseq
        %v893 = vshrl.u32 %v892, 7
        %v894 = vadd.s32 %v893, 8
        %v895 = vmax.f32 %v818, 0.0
        %v896 = vmax.f32 %v841, 0.0
        %v897 = vmax.f32 %v864, 0.0
        %v898 = vmax.f32 %v887, 0.0
        %v899 = vmax.f32 %v821, 0.0
        %v900 = vmax.f32 %v844, 0.0
        %v901 = vmax.f32 %v867, 0.0
        %v902 = vmax.f32 %v890, 0.0
        %v903 = vxor.u32 %v818, 2147483648
        %v904 = vxor.u32 %v841, 2147483648
        %v905 = vxor.u32 %v864, 2147483648
        %v906 = vxor.u32 %v887, 2147483648
        %v907 = vxor.u32 %v821, 2147483648
        %v908 = vxor.u32 %v844, 2147483648
        %v909 = vxor.u32 %v867, 2147483648
        %v910 = vxor.u32 %v890, 2147483648
        %v911 = vmul.f32 %v903, 1.442695
        %v912 = vpow.pop %v911
        %v913 = vmul.f32 %v904, 1.442695
        %v914 = vpow.pop %v913
        %v915 = vmul.f32 %v905, 1.442695
        %v916 = vpow.pop %v915
        %v917 = vmul.f32 %v906, 1.442695
        %v918 = vpow.pop %v917
        %v919 = vmul.f32 %v907, 1.442695
        %v920 = vpow.pop %v919
        %v921 = vmul.f32 %v908, 1.442695
        %v922 = vpow.pop %v921
        %v923 = vmul.f32 %v909, 1.442695
        %v924 = vpow.pop %v923
        %v925 = vmul.f32 %v910, 1.442695
        %v926 = vpow.pop %v925
        %v927 = vadd.f32 %v912, 1.0
        %v928 = vadd.f32 %v914, 1.0
        %v929 = vadd.f32 %v916, 1.0
        %v930 = vadd.f32 %v918, 1.0
        %v931 = vadd.f32 %v920, 1.0
        %v932 = vadd.f32 %v922, 1.0
        %v933 = vadd.f32 %v924, 1.0
        %v934 = vadd.f32 %v926, 1.0
        %v935 = vrcp.pop %v927
        %v936 = vmul.f32 %v927, %v935
        %v937 = vsub.f32 1.0, %v936
        %v938 = vmul.f32 %v935, %v937
        %v939 = vadd.f32 %v935, %v938
        %vm940 = vweird.f32 %v927
        %vm941 = vweird.f32 %v935
        %vm942 = vmor %vm940, %vm941
        %v943 = vsel %vm942, %v935, %v939
        %v944 = vand.u32 2147483647, %v927
        %vm945 = vcmp.eq.f32.partialorder %v944, 8.507059e+37
        %v946 = vand.u32 %v927, 2147483648
        %v947 = vor.u32 1.1754944e-38, %v946
        %v948 = vsel %vm945, %v947, %v943
        %v949 = vmul.f32 1.0, %v948
        %v950 = vrcp.pop %v928
        %v951 = vmul.f32 %v928, %v950
        %v952 = vsub.f32 1.0, %v951
        %v953 = vmul.f32 %v950, %v952
        %v954 = vadd.f32 %v950, %v953
        %vm955 = vweird.f32 %v928
        %vm956 = vweird.f32 %v950
        %vm957 = vmor %vm955, %vm956
        %v958 = vsel %vm957, %v950, %v954
        %v959 = vand.u32 2147483647, %v928
        %vm960 = vcmp.eq.f32.partialorder %v959, 8.507059e+37
        %v961 = vand.u32 %v928, 2147483648
        %v962 = vor.u32 1.1754944e-38, %v961
        %v963 = vsel %vm960, %v962, %v958
        %v964 = vmul.f32 1.0, %v963
        %v965 = vrcp.pop %v929
        %v966 = vmul.f32 %v929, %v965
        %v967 = vsub.f32 1.0, %v966
        %v968 = vmul.f32 %v965, %v967
        %v969 = vadd.f32 %v965, %v968
        %vm970 = vweird.f32 %v929
        %vm971 = vweird.f32 %v965
        %vm972 = vmor %vm970, %vm971
        %v973 = vsel %vm972, %v965, %v969
        %v974 = vand.u32 2147483647, %v929
        %vm975 = vcmp.eq.f32.partialorder %v974, 8.507059e+37
        %v976 = vand.u32 %v929, 2147483648
        %v977 = vor.u32 1.1754944e-38, %v976
        %v978 = vsel %vm975, %v977, %v973
        %v979 = vmul.f32 1.0, %v978
        %v980 = vrcp.pop %v930
        %v981 = vmul.f32 %v930, %v980
        %v982 = vsub.f32 1.0, %v981
        %v983 = vmul.f32 %v980, %v982
        %v984 = vadd.f32 %v980, %v983
        %vm985 = vweird.f32 %v930
        %vm986 = vweird.f32 %v980
        %vm987 = vmor %vm985, %vm986
        %v988 = vsel %vm987, %v980, %v984
        %v989 = vand.u32 2147483647, %v930
        %vm990 = vcmp.eq.f32.partialorder %v989, 8.507059e+37
        %v991 = vand.u32 %v930, 2147483648
        %v992 = vor.u32 1.1754944e-38, %v991
        %v993 = vsel %vm990, %v992, %v988
        %v994 = vmul.f32 1.0, %v993
        %v995 = vrcp.pop %v931
        %v996 = vmul.f32 %v931, %v995
        %v997 = vsub.f32 1.0, %v996
        %v998 = vmul.f32 %v995, %v997
        %v999 = vadd.f32 %v995, %v998
        %vm1000 = vweird.f32 %v931
        %vm1001 = vweird.f32 %v995
        %vm1002 = vmor %vm1000, %vm1001
        %v1003 = vsel %vm1002, %v995, %v999
        %v1004 = vand.u32 2147483647, %v931
        %vm1005 = vcmp.eq.f32.partialorder %v1004, 8.507059e+37
        %v1006 = vand.u32 %v931, 2147483648
        %v1007 = vor.u32 1.1754944e-38, %v1006
        %v1008 = vsel %vm1005, %v1007, %v1003
        %v1009 = vmul.f32 1.0, %v1008
        %v1010 = vrcp.pop %v932
        %v1011 = vmul.f32 %v932, %v1010
        %v1012 = vsub.f32 1.0, %v1011
        %v1013 = vmul.f32 %v1010, %v1012
        %v1014 = vadd.f32 %v1010, %v1013
        %vm1015 = vweird.f32 %v932
        %vm1016 = vweird.f32 %v1010
        %vm1017 = vmor %vm1015, %vm1016
        %v1018 = vsel %vm1017, %v1010, %v1014
        %v1019 = vand.u32 2147483647, %v932
        %vm1020 = vcmp.eq.f32.partialorder %v1019, 8.507059e+37
        %v1021 = vand.u32 %v932, 2147483648
        %v1022 = vor.u32 1.1754944e-38, %v1021
        %v1023 = vsel %vm1020, %v1022, %v1018
        %v1024 = vmul.f32 1.0, %v1023
        %v1025 = vrcp.pop %v933
        %v1026 = vmul.f32 %v933, %v1025
        %v1027 = vsub.f32 1.0, %v1026
        %v1028 = vmul.f32 %v1025, %v1027
        %v1029 = vadd.f32 %v1025, %v1028
        %vm1030 = vweird.f32 %v933
        %vm1031 = vweird.f32 %v1025
        %vm1032 = vmor %vm1030, %vm1031
        %v1033 = vsel %vm1032, %v1025, %v1029
        %v1034 = vand.u32 2147483647, %v933
        %vm1035 = vcmp.eq.f32.partialorder %v1034, 8.507059e+37
        %v1036 = vand.u32 %v933, 2147483648
        %v1037 = vor.u32 1.1754944e-38, %v1036
        %v1038 = vsel %vm1035, %v1037, %v1033
        %v1039 = vmul.f32 1.0, %v1038
        %v1040 = vrcp.pop %v934
        %v1041 = vmul.f32 %v934, %v1040
        %v1042 = vsub.f32 1.0, %v1041
        %v1043 = vmul.f32 %v1040, %v1042
        %v1044 = vadd.f32 %v1040, %v1043
        %vm1045 = vweird.f32 %v934
        %vm1046 = vweird.f32 %v1040
        %vm1047 = vmor %vm1045, %vm1046
        %v1048 = vsel %vm1047, %v1040, %v1044
        %v1049 = vand.u32 2147483647, %v934
        %vm1050 = vcmp.eq.f32.partialorder %v1049, 8.507059e+37
        %v1051 = vand.u32 %v934, 2147483648
        %v1052 = vor.u32 1.1754944e-38, %v1051
        %v1053 = vsel %vm1050, %v1052, %v1048
        %v1054 = vmul.f32 1.0, %v1053
        %vm1055 = vcmp.lt.s32.totalorder %v893, 3
        %vm1056 = vcmp.lt.s32.totalorder %v894, 3
        %vm1057 = vcmp.lt.s32.totalorder %v893, 6
        %vm1058 = vcmp.lt.s32.totalorder %v894, 6
        %vm1059 = vcmp.lt.s32.totalorder %v893, 9
        %vm1060 = vcmp.lt.s32.totalorder %v894, 9
        %v1061 = vsel %vm1059, %v895, 1.0
        %v1062 = vsel %vm1059, %v896, 1.0
        %v1063 = vsel %vm1059, %v897, 1.0
        %v1064 = vsel %vm1059, %v898, 1.0
        %v1065 = vsel %vm1060, %v899, 1.0
        %v1066 = vsel %vm1060, %v900, 1.0
        %v1067 = vsel %vm1060, %v901, 1.0
        %v1068 = vsel %vm1060, %v902, 1.0
        %v1069 = vsel %vm1057, %v949, %v1061
        %v1070 = vsel %vm1057, %v964, %v1062
        %v1071 = vsel %vm1057, %v979, %v1063
        %v1072 = vsel %vm1057, %v994, %v1064
        %v1073 = vsel %vm1058, %v1009, %v1065
        %v1074 = vsel %vm1058, %v1024, %v1066
        %v1075 = vsel %vm1058, %v1039, %v1067
        %v1076 = vsel %vm1058, %v1054, %v1068
        %v1077 = vsel %vm1055, %v895, %v1069
        %v1078 = vsel %vm1055, %v896, %v1070
        %v1079 = vsel %vm1055, %v897, %v1071
        %v1080 = vsel %vm1055, %v898, %v1072
        %v1081 = vsel %vm1056, %v899, %v1073
        %v1082 = vsel %vm1056, %v900, %v1074
        %v1083 = vsel %vm1056, %v901, %v1075
        %v1084 = vsel %vm1056, %v902, %v1076
        %1085 = vst [vmem:[%s230] sm:$0xff] %v1077
        %1086 = vst [vmem:[%s230 + $0x8] sm:$0xff] %v1078
        %1087 = vst [vmem:[%s230 + $0x10] sm:$0xff] %v1079
        %1088 = vst [vmem:[%s230 + $0x18] sm:$0xff] %v1080
        %1089 = vst [vmem:[%s230 + $0x20] sm:$0xf] %v1081
        %1090 = vst [vmem:[%s230 + $0x28] sm:$0xf] %v1082
        %1091 = vst [vmem:[%s230 + $0x30] sm:$0xf] %v1083
        %1092 = vst [vmem:[%s230 + $0x38] sm:$0xf] %v1084
        %s1093 = sand.u32 %s137, 1
        %s1094 = scalar_lea.sflag [#allocation3], %s1093
        %s1095 = sand.u32 %s137, 1
        %s1096 = smul.addr %s1095, 64
        %s1097 = scalar_lea.vmem [#allocation2], %s1096
        // Predicated region
        $region41: #{tpu_custom_call.1} parent=39 // pred_check
          %p1098 = pneg %p147
        $region42: #{tpu_custom_call.1} parent=39 // pred_check_branch
          %1100 = sbr.rel (%p1098) target = $region44
        $region43: #{tpu_custom_call.1} parent=39 // pred_region
          %s1101 = smul.u32 4, %s19
          %1103 = vsyncadd %s1094, 0
          %s1104 = smul.addr %s1101, 8
          %s1105 = scalar_lea.hbm %s5, %s1104
          %s1106 = sshll.u32 %s1097, 4
          %s1107 = int_to_ptr.vmem [resolvable:$true] %s1106
          %s1108 = sshll.u32 %s1105, 4
          %s1109 = int_to_ptr.hbm [resolvable:$true] %s1108
          %1114 = dma.vmem_to_hbm [thread:$0]  %s1107, 1024, %s1109, %s1094, 512, 2048, 32
        $region44: #{tpu_custom_call.1} parent=39 // pred_fallthru
          _
      $region40: #{tpu_custom_call.1} parent=5 // pred_fallthru
        _
      %p1115 = scmp.le.s32.totalorder 2, %s14
      // Predicated region
      $region45: #{tpu_custom_call.1} parent=5 // pred_check
        %p1116 = pneg %p1115
      $region46: #{tpu_custom_call.1} parent=5 // pred_check_branch
        %1118 = sbr.rel (%p1116) target = $region48
      $region47: #{tpu_custom_call.1} parent=5 // pred_region
        %s1119 = ssub.s32 %s14, 2
        // Predicated region
        $region49: #{tpu_custom_call.1} parent=47 // pred_check
          %p1120 = pneg %p153
        $region50: #{tpu_custom_call.1} parent=47 // pred_check_branch
          %1122 = sbr.rel (%p1120) target = $region52
        $region51: #{tpu_custom_call.1} parent=47 // pred_region
          %s1123 = sand.u32 %s138, 1
          %s1124 = scalar_lea.sflag [#allocation3], %s1123
          %s1125 = sand.u32 %s138, 1
          %s1126 = smul.addr %s1125, 64
          %s1127 = scalar_lea.vmem [#allocation2], %s1126
          %1129 = dma.done %s1124, 1024
        $region52: #{tpu_custom_call.1} parent=47 // pred_fallthru
          _
      $region48: #{tpu_custom_call.1} parent=5 // pred_fallthru
        _
    $region6: #{tpu_custom_call.1} parent=1 // loop_footer
      %s18 = sadd.s32 1, %s14
    $region7: #{tpu_custom_call.1} parent=1 // loop_footer_branch
      %13 = sbr.rel target = $region3
    $region8: #{tpu_custom_call.1} parent=1 // loop_exit
      _
    %1130 = vsyncpa [#allocation3], 1
    %s1131 = scalar_lea.sflag [#allocation3], 1
    %1132 = vsyncpa %s1131, 1

</llo_original>
